<compile_context>
chip_gen: v5e
topology: v5e:2x2
jax: 0.10.0
libtpu: 0.0.40
codegen_flags: <defaults>
</compile_context>

<pallas_src>
import functools

import jax
import jax.numpy as jnp
from jax.experimental import pallas as pl
from jax.experimental.pallas import tpu as pltpu

INPUT_DIM = 28 * 28
HIDDEN_LAYERS = [32, 16, 32]
OUTPUT_DIM = 10


def _round_up(a, m):
    return (a + m - 1) // m * m


def mlp_kernel(x_ref, w1_ref, b1_ref, w2_ref, b2_ref, w3_ref, b3_ref,
               w4_ref, b4_ref, o_ref):
    # Four tiny matmuls + ReLUs fused; weights/biases stay resident in VMEM
    # across the whole grid (constant block index), only x tiles stream from HBM.
    h = jnp.dot(x_ref[...], w1_ref[...], preferred_element_type=jnp.float32)
    h = jnp.maximum(h + b1_ref[...], 0.0)

    h = jnp.dot(h, w2_ref[...], preferred_element_type=jnp.float32)
    h = jnp.maximum(h + b2_ref[...], 0.0)

    h = jnp.dot(h, w3_ref[...], preferred_element_type=jnp.float32)
    h = jnp.maximum(h + b3_ref[...], 0.0)

    h = jnp.dot(h, w4_ref[...], preferred_element_type=jnp.float32)
    o_ref[...] = (h + b4_ref[...]).astype(o_ref.dtype)


@functools.partial(jax.jit, static_argnames=("tile_b",))
def mlp_forward(x, params, tile_b=1024):
    """x: (B, INPUT_DIM) f32; params: W1..W4 stored (in, out), b1..b4 (1, out) f32."""
    B, D = x.shape
    assert D == INPUT_DIM

    # Tile: multiple of 16, no larger than ~B/2 so the grid has >= 2 parallel
    # steps (keeps both TensorCores busy on v7x), and never smaller than 16.
    half_b = -(-B // 2)  # cdiv(B, 2)
    tile_eff = max(16, min(_round_up(tile_b, 16), _round_up(half_b, 16)))
    grid = pl.cdiv(B, tile_eff)  # ragged last tile handled by masked stores

    w1, b1 = params["w1"], params["b1"]
    w2, b2 = params["w2"], params["b2"]
    w3, b3 = params["w3"], params["b3"]
    w4, b4 = params["w4"], params["b4"]

    def rep(shape):  # replicated block: same (0, 0) block every grid step
        return pl.BlockSpec(shape, lambda i: (0, 0))

    out = pl.pallas_call(
        mlp_kernel,
        out_shape=jax.ShapeDtypeStruct((B, OUTPUT_DIM), jnp.float32),
        grid_spec=pltpu.PrefetchScalarGridSpec(
            num_scalar_prefetch=0,
            grid=(grid,),
            in_specs=[
                pl.BlockSpec((tile_eff, D), lambda i: (i, 0)),   # x tile (streamed)
                rep(w1.shape), rep(b1.shape),
                rep(w2.shape), rep(b2.shape),
                rep(w3.shape), rep(b3.shape),
                rep(w4.shape), rep(b4.shape),
            ],
            out_specs=pl.BlockSpec((tile_eff, OUTPUT_DIM), lambda i: (i, 0)),
        ),
        compiler_params=pltpu.CompilerParams(
            dimension_semantics=("parallel",),
            vmem_limit_bytes=32 * 1024 * 1024),
    )(x, w1, b1, w2, b2, w3, b3, w4, b4)

    return out


def init_params(key):
    """Deterministic init mimicking nn.Linear default: U(-1/sqrt(fan_in), +1/sqrt(fan_in))."""
    dims = [INPUT_DIM] + HIDDEN_LAYERS + [OUTPUT_DIM]
    params = {}
    for idx in range(4):
        fan_in, fan_out = dims[idx], dims[idx + 1]
        key, kw, kb = jax.random.split(key, 3)
        bound = 1.0 / jnp.sqrt(fan_in)
        # stored as (in, out) so the kernel does x @ W (== PyTorch x @ W.T + b)
        params[f"w{idx + 1}"] = jax.random.uniform(
            kw, (fan_in, fan_out), jnp.float32, -bound, bound)
        params[f"b{idx + 1}"] = jax.random.uniform(
            kb, (1, fan_out), jnp.float32, -bound, bound)
    return params


def mlp_reference(x, params):
    """Pure-JAX f32 reference (same semantics as the PyTorch module)."""
    h = x
    for i in range(1, 4):
        h = jnp.maximum(
            jnp.dot(h, params[f"w{i}"], preferred_element_type=jnp.float32)
            + params[f"b{i}"], 0.0)
    return jnp.dot(h, params["w4"], preferred_element_type=jnp.float32) + params["b4"]


if __name__ == "__main__":
    key = jax.random.PRNGKey(0)
    key, kx1, kx2 = jax.random.split(key, 3)
    params = init_params(key)

    # Small demo batch (tile collapses to 16 rows, single masked boundary tile).
    x_small = jax.random.normal(kx1, (8, INPUT_DIM), jnp.float32)
    out_small = mlp_forward(x_small, params)
    jax.block_until_ready(out_small)
    ref_small = mlp_reference(x_small, params)
    assert out_small.shape == (8, OUTPUT_DIM)
    assert jnp.allclose(out_small, ref_small, atol=1e-2, rtol=1e-2), \
        "mismatch vs reference (small batch)"

    # Non-divisible batch exercising a multi-step grid with a ragged last tile.
    x_big = jax.random.normal(kx2, (300, INPUT_DIM), jnp.float32)
    out_big = mlp_forward(x_big, params, tile_b=128)
    jax.block_until_ready(out_big)
    ref_big = mlp_reference(x_big, params)
    assert out_big.shape == (300, OUTPUT_DIM)
    assert jnp.allclose(out_big, ref_big, atol=1e-2, rtol=1e-2), \
        "mismatch vs reference (ragged batch)"

    print("KERNEL_OK")
</pallas_src>

<mosaic_0001>
module attributes {stable_mosaic.version = 11 : i64} {
  func.func @mlp_kernel(%arg0: i32, %arg1: memref<16x784xf32, #tpu.memory_space<vmem>>, %arg2: memref<784x32xf32, #tpu.memory_space<vmem>>, %arg3: memref<1x32xf32, #tpu.memory_space<vmem>>, %arg4: memref<32x16xf32, #tpu.memory_space<vmem>>, %arg5: memref<1x16xf32, #tpu.memory_space<vmem>>, %arg6: memref<16x32xf32, #tpu.memory_space<vmem>>, %arg7: memref<1x32xf32, #tpu.memory_space<vmem>>, %arg8: memref<32x10xf32, #tpu.memory_space<vmem>>, %arg9: memref<1x10xf32, #tpu.memory_space<vmem>>, %arg10: memref<16x10xf32, #tpu.memory_space<vmem>>) attributes {dimension_semantics = [#tpu.dimension_semantics<parallel>], iteration_bounds = array<i64: 1>, scalar_prefetch = 0 : i64, scratch_operands = 0 : i64, tpu.core_type = #tpu.core_type<tc>, window_params = [{transform_indices = @transform_0, window_bounds = array<i64: 16, 784>}, {pipeline_mode = #tpu.pipeline_mode<synchronous>, transform_indices = @transform_1, window_bounds = array<i64: 784, 32>}, {pipeline_mode = #tpu.pipeline_mode<synchronous>, transform_indices = @transform_2, window_bounds = array<i64: 1, 32>}, {pipeline_mode = #tpu.pipeline_mode<synchronous>, transform_indices = @transform_3, window_bounds = array<i64: 32, 16>}, {pipeline_mode = #tpu.pipeline_mode<synchronous>, transform_indices = @transform_4, window_bounds = array<i64: 1, 16>}, {pipeline_mode = #tpu.pipeline_mode<synchronous>, transform_indices = @transform_5, window_bounds = array<i64: 16, 32>}, {pipeline_mode = #tpu.pipeline_mode<synchronous>, transform_indices = @transform_6, window_bounds = array<i64: 1, 32>}, {pipeline_mode = #tpu.pipeline_mode<synchronous>, transform_indices = @transform_7, window_bounds = array<i64: 32, 10>}, {pipeline_mode = #tpu.pipeline_mode<synchronous>, transform_indices = @transform_8, window_bounds = array<i64: 1, 10>}, {transform_indices = @transform_9, window_bounds = array<i64: 16, 10>}]} {
    %c0 = arith.constant 0 : index
    %c0_0 = arith.constant 0 : index
    %0 = vector.load %arg1[%c0, %c0_0] : memref<16x784xf32, #tpu.memory_space<vmem>>, vector<16x784xf32>
    %c0_1 = arith.constant 0 : index
    %c0_2 = arith.constant 0 : index
    %1 = vector.load %arg2[%c0_1, %c0_2] : memref<784x32xf32, #tpu.memory_space<vmem>>, vector<784x32xf32>
    %cst = arith.constant dense<0.000000e+00> : vector<16x32xf32>
    %2 = tpu.matmul %0, %1, %cst {dimension_numbers = #tpu.dot_dimension_numbers<[1], [0], [0], [1], [0, 0, 1, 1], [], []>} : vector<16x784xf32>, vector<784x32xf32>, vector<16x32xf32> -> vector<16x32xf32>
    %c0_3 = arith.constant 0 : index
    %c0_4 = arith.constant 0 : index
    %3 = vector.load %arg3[%c0_3, %c0_4] : memref<1x32xf32, #tpu.memory_space<vmem>>, vector<1x32xf32>
    %4 = vector.broadcast %3 : vector<1x32xf32> to vector<16x32xf32>
    %5 = arith.addf %2, %4 : vector<16x32xf32>
    %cst_5 = arith.constant 0.000000e+00 : f32
    %6 = vector.broadcast %cst_5 : f32 to vector<16x32xf32>
    %7 = arith.maximumf %5, %6 : vector<16x32xf32>
    %c0_6 = arith.constant 0 : index
    %c0_7 = arith.constant 0 : index
    %8 = vector.load %arg4[%c0_6, %c0_7] : memref<32x16xf32, #tpu.memory_space<vmem>>, vector<32x16xf32>
    %cst_8 = arith.constant dense<0.000000e+00> : vector<16x16xf32>
    %9 = tpu.matmul %7, %8, %cst_8 {dimension_numbers = #tpu.dot_dimension_numbers<[1], [0], [0], [1], [0, 0, 1, 1], [], []>} : vector<16x32xf32>, vector<32x16xf32>, vector<16x16xf32> -> vector<16x16xf32>
    %c0_9 = arith.constant 0 : index
    %c0_10 = arith.constant 0 : index
    %10 = vector.load %arg5[%c0_9, %c0_10] : memref<1x16xf32, #tpu.memory_space<vmem>>, vector<1x16xf32>
    %11 = vector.broadcast %10 : vector<1x16xf32> to vector<16x16xf32>
    %12 = arith.addf %9, %11 : vector<16x16xf32>
    %cst_11 = arith.constant 0.000000e+00 : f32
    %13 = vector.broadcast %cst_11 : f32 to vector<16x16xf32>
    %14 = arith.maximumf %12, %13 : vector<16x16xf32>
    %c0_12 = arith.constant 0 : index
    %c0_13 = arith.constant 0 : index
    %15 = vector.load %arg6[%c0_12, %c0_13] : memref<16x32xf32, #tpu.memory_space<vmem>>, vector<16x32xf32>
    %cst_14 = arith.constant dense<0.000000e+00> : vector<16x32xf32>
    %16 = tpu.matmul %14, %15, %cst_14 {dimension_numbers = #tpu.dot_dimension_numbers<[1], [0], [0], [1], [0, 0, 1, 1], [], []>} : vector<16x16xf32>, vector<16x32xf32>, vector<16x32xf32> -> vector<16x32xf32>
    %c0_15 = arith.constant 0 : index
    %c0_16 = arith.constant 0 : index
    %17 = vector.load %arg7[%c0_15, %c0_16] : memref<1x32xf32, #tpu.memory_space<vmem>>, vector<1x32xf32>
    %18 = vector.broadcast %17 : vector<1x32xf32> to vector<16x32xf32>
    %19 = arith.addf %16, %18 : vector<16x32xf32>
    %cst_17 = arith.constant 0.000000e+00 : f32
    %20 = vector.broadcast %cst_17 : f32 to vector<16x32xf32>
    %21 = arith.maximumf %19, %20 : vector<16x32xf32>
    %c0_18 = arith.constant 0 : index
    %c0_19 = arith.constant 0 : index
    %22 = vector.load %arg8[%c0_18, %c0_19] : memref<32x10xf32, #tpu.memory_space<vmem>>, vector<32x10xf32>
    %cst_20 = arith.constant dense<0.000000e+00> : vector<16x10xf32>
    %23 = tpu.matmul %21, %22, %cst_20 {dimension_numbers = #tpu.dot_dimension_numbers<[1], [0], [0], [1], [0, 0, 1, 1], [], []>} : vector<16x32xf32>, vector<32x10xf32>, vector<16x10xf32> -> vector<16x10xf32>
    %c0_21 = arith.constant 0 : index
    %c0_22 = arith.constant 0 : index
    %24 = vector.load %arg9[%c0_21, %c0_22] : memref<1x10xf32, #tpu.memory_space<vmem>>, vector<1x10xf32>
    %25 = vector.broadcast %24 : vector<1x10xf32> to vector<16x10xf32>
    %26 = arith.addf %23, %25 : vector<16x10xf32>
    %c0_23 = arith.constant 0 : index
    %c0_24 = arith.constant 0 : index
    %27 = vector.load %arg10[%c0_23, %c0_24] : memref<16x10xf32, #tpu.memory_space<vmem>>, vector<16x10xf32>
    tpu.vector_store %arg10[%c0_23, %c0_24], %26 {strides = array<i32>} : memref<16x10xf32, #tpu.memory_space<vmem>>, vector<16x10xf32>,
    return
  }
  func.func @transform_0(%arg0: i32) -> (i32, i32) {
    %c0_i32 = arith.constant 0 : i32
    %c0_i32_0 = arith.constant 0 : i32
    return %arg0, %c0_i32 : i32, i32
  }
  func.func @transform_1(%arg0: i32) -> (i32, i32) {
    %c0_i32 = arith.constant 0 : i32
    %c0_i32_0 = arith.constant 0 : i32
    %c0_i32_1 = arith.constant 0 : i32
    return %c0_i32, %c0_i32_0 : i32, i32
  }
  func.func @transform_2(%arg0: i32) -> (i32, i32) {
    %c0_i32 = arith.constant 0 : i32
    %c0_i32_0 = arith.constant 0 : i32
    %c0_i32_1 = arith.constant 0 : i32
    return %c0_i32, %c0_i32_0 : i32, i32
  }
  func.func @transform_3(%arg0: i32) -> (i32, i32) {
    %c0_i32 = arith.constant 0 : i32
    %c0_i32_0 = arith.constant 0 : i32
    %c0_i32_1 = arith.constant 0 : i32
    return %c0_i32, %c0_i32_0 : i32, i32
  }
  func.func @transform_4(%arg0: i32) -> (i32, i32) {
    %c0_i32 = arith.constant 0 : i32
    %c0_i32_0 = arith.constant 0 : i32
    %c0_i32_1 = arith.constant 0 : i32
    return %c0_i32, %c0_i32_0 : i32, i32
  }
  func.func @transform_5(%arg0: i32) -> (i32, i32) {
    %c0_i32 = arith.constant 0 : i32
    %c0_i32_0 = arith.constant 0 : i32
    %c0_i32_1 = arith.constant 0 : i32
    return %c0_i32, %c0_i32_0 : i32, i32
  }
  func.func @transform_6(%arg0: i32) -> (i32, i32) {
    %c0_i32 = arith.constant 0 : i32
    %c0_i32_0 = arith.constant 0 : i32
    %c0_i32_1 = arith.constant 0 : i32
    return %c0_i32, %c0_i32_0 : i32, i32
  }
  func.func @transform_7(%arg0: i32) -> (i32, i32) {
    %c0_i32 = arith.constant 0 : i32
    %c0_i32_0 = arith.constant 0 : i32
    %c0_i32_1 = arith.constant 0 : i32
    return %c0_i32, %c0_i32_0 : i32, i32
  }
  func.func @transform_8(%arg0: i32) -> (i32, i32) {
    %c0_i32 = arith.constant 0 : i32
    %c0_i32_0 = arith.constant 0 : i32
    %c0_i32_1 = arith.constant 0 : i32
    return %c0_i32, %c0_i32_0 : i32, i32
  }
  func.func @transform_9(%arg0: i32) -> (i32, i32) {
    %c0_i32 = arith.constant 0 : i32
    %c0_i32_0 = arith.constant 0 : i32
    return %arg0, %c0_i32 : i32, i32
  }
}

</mosaic_0001>

<llo_original>
// kernel: mlp_forward.1
$region0: #{mlp_forward.1}
  #allocation0 [shape = 'u32[]', space=smem, size = 0x4, offset = 0x4, fixed_abs, tag = 'smem constant byte address 0x4 - core index']
  #allocation1 [shape = 'u32[72,128]{1,0:T(1,128)}', space=vmem, size = 0x9000, scoped, tag = 'internal scratch']
  %s0 = inlined_call_operand.vmem [shape: f32[8,784], index: 0, kind: input, shape index: {}]
  %s1 = inlined_call_operand.vmem [shape: f32[784,32], index: 1, kind: input, shape index: {}]
  %s2 = inlined_call_operand.vmem [shape: f32[1,32], index: 2, kind: input, shape index: {}]
  %s3 = inlined_call_operand.vmem [shape: f32[32,16], index: 3, kind: input, shape index: {}]
  %s4 = inlined_call_operand.vmem [shape: f32[1,16], index: 4, kind: input, shape index: {}]
  %s5 = inlined_call_operand.vmem [shape: f32[16,32], index: 5, kind: input, shape index: {}]
  %s6 = inlined_call_operand.vmem [shape: f32[1,32], index: 6, kind: input, shape index: {}]
  %s7 = inlined_call_operand.vmem [shape: f32[32,10], index: 7, kind: input, shape index: {}]
  %s8 = inlined_call_operand.vmem [shape: f32[1,10], index: 8, kind: input, shape index: {}]
  %s9 = inlined_call_operand.hbm [shape: f32[8,10], index: 9, kind: output, shape index: {}]
  %s10 = sld [smem:[#allocation0]]
  $region46: #{mlp_forward.1} parent=0
    _
  %s12 = ssub.s32 1, %s10
  %s13 = scalar_select 0, %s12, %s10
  $region1: #{mlp_forward.1} parent=0
    #allocation2 [shape = 'u8[8192]{0}', space=vmem, size = 0x2000, scoped, tag = 'output window, operand 0, single buffered']
    #allocation3 [shape = 's32[1]{0}', space=sflag, size = 0x4, scoped, tag = 'scoped memory for mlp_forward.1']
    %14 = vsyncpa [#allocation3], 0
    // Predicated region
    $region2: #{mlp_forward.1} parent=1 // pred_check
      _
    $region3: #{mlp_forward.1} parent=1 // pred_check_branch
      %16 = sbr.rel (0) target = $region5
    $region4: #{mlp_forward.1} parent=1 // pred_region
      _
    $region5: #{mlp_forward.1} parent=1 // pred_fallthru
      _
    // Predicated region
    $region6: #{mlp_forward.1} parent=1 // pred_check
      _
    $region7: #{mlp_forward.1} parent=1 // pred_check_branch
      %18 = sbr.rel (0) target = $region9
    $region8: #{mlp_forward.1} parent=1 // pred_region
      _
    $region9: #{mlp_forward.1} parent=1 // pred_fallthru
      _
    // Predicated region
    $region10: #{mlp_forward.1} parent=1 // pred_check
      _
    $region11: #{mlp_forward.1} parent=1 // pred_check_branch
      %20 = sbr.rel (0) target = $region13
    $region12: #{mlp_forward.1} parent=1 // pred_region
      _
    $region13: #{mlp_forward.1} parent=1 // pred_fallthru
      _
    // Predicated region
    $region14: #{mlp_forward.1} parent=1 // pred_check
      _
    $region15: #{mlp_forward.1} parent=1 // pred_check_branch
      %22 = sbr.rel (0) target = $region17
    $region16: #{mlp_forward.1} parent=1 // pred_region
      _
    $region17: #{mlp_forward.1} parent=1 // pred_fallthru
      _
    // Predicated region
    $region18: #{mlp_forward.1} parent=1 // pred_check
      _
    $region19: #{mlp_forward.1} parent=1 // pred_check_branch
      %24 = sbr.rel (0) target = $region21
    $region20: #{mlp_forward.1} parent=1 // pred_region
      _
    $region21: #{mlp_forward.1} parent=1 // pred_fallthru
      _
    // Predicated region
    $region22: #{mlp_forward.1} parent=1 // pred_check
      _
    $region23: #{mlp_forward.1} parent=1 // pred_check_branch
      %26 = sbr.rel (0) target = $region25
    $region24: #{mlp_forward.1} parent=1 // pred_region
      _
    $region25: #{mlp_forward.1} parent=1 // pred_fallthru
      _
    // Predicated region
    $region26: #{mlp_forward.1} parent=1 // pred_check
      _
    $region27: #{mlp_forward.1} parent=1 // pred_check_branch
      %28 = sbr.rel (0) target = $region29
    $region28: #{mlp_forward.1} parent=1 // pred_region
      _
    $region29: #{mlp_forward.1} parent=1 // pred_fallthru
      _
    // Predicated region
    $region30: #{mlp_forward.1} parent=1 // pred_check
      _
    $region31: #{mlp_forward.1} parent=1 // pred_check_branch
      %30 = sbr.rel (0) target = $region33
    $region32: #{mlp_forward.1} parent=1 // pred_region
      _
    $region33: #{mlp_forward.1} parent=1 // pred_fallthru
      _
    // Predicated region
    $region34: #{mlp_forward.1} parent=1 // pred_check
      _
    $region35: #{mlp_forward.1} parent=1 // pred_check_branch
      %32 = sbr.rel (0) target = $region37
    $region36: #{mlp_forward.1} parent=1 // pred_region
      _
    $region37: #{mlp_forward.1} parent=1 // pred_fallthru
      _
    %v33 = vld [vmem:[%s0] sm:$0xff]
    %v34 = vld [vmem:[%s0 + $0x8] sm:$0xff]
    %v35 = vld [vmem:[%s0 + $0x10] sm:$0xff]
    %v36 = vld [vmem:[%s0 + $0x18] sm:$0xff]
    %v37 = vld [vmem:[%s0 + $0x20] sm:$0xff]
    %v38 = vld [vmem:[%s0 + $0x28] sm:$0xff]
    %v39 = vld [vmem:[%s0 + $0x30] sm:$0xff]
    %v40 = vld [vmem:[%s0 + $0x38] sm:$0xff]
    %v41 = vld [vmem:[%s0 + $0x40] sm:$0xff]
    %v42 = vld [vmem:[%s0 + $0x48] sm:$0xff]
    %v43 = vld [vmem:[%s0 + $0x50] sm:$0xff]
    %v44 = vld [vmem:[%s0 + $0x58] sm:$0xff]
    %v45 = vld [vmem:[%s0 + $0x60] sm:$0xff]
    %v46 = vld [vmem:[%s0 + $0x68] sm:$0xff]
    %v47 = vld [vmem:[%s1] sm:$0xff]
    %v48 = vld [vmem:[%s1 + $0x8] sm:$0xff]
    %v49 = vld [vmem:[%s1 + $0x10] sm:$0xff]
    %v50 = vld [vmem:[%s1 + $0x18] sm:$0xff]
    %v51 = vld [vmem:[%s1 + $0x20] sm:$0xff]
    %v52 = vld [vmem:[%s1 + $0x28] sm:$0xff]
    %v53 = vld [vmem:[%s1 + $0x30] sm:$0xff]
    %v54 = vld [vmem:[%s1 + $0x38] sm:$0xff]
    %v55 = vld [vmem:[%s1 + $0x40] sm:$0xff]
    %v56 = vld [vmem:[%s1 + $0x48] sm:$0xff]
    %v57 = vld [vmem:[%s1 + $0x50] sm:$0xff]
    %v58 = vld [vmem:[%s1 + $0x58] sm:$0xff]
    %v59 = vld [vmem:[%s1 + $0x60] sm:$0xff]
    %v60 = vld [vmem:[%s1 + $0x68] sm:$0xff]
    %v61 = vld [vmem:[%s1 + $0x70] sm:$0xff]
    %v62 = vld [vmem:[%s1 + $0x78] sm:$0xff]
    %v63 = vld [vmem:[%s1 + $0x80] sm:$0xff]
    %v64 = vld [vmem:[%s1 + $0x88] sm:$0xff]
    %v65 = vld [vmem:[%s1 + $0x90] sm:$0xff]
    %v66 = vld [vmem:[%s1 + $0x98] sm:$0xff]
    %v67 = vld [vmem:[%s1 + $0xa0] sm:$0xff]
    %v68 = vld [vmem:[%s1 + $0xa8] sm:$0xff]
    %v69 = vld [vmem:[%s1 + $0xb0] sm:$0xff]
    %v70 = vld [vmem:[%s1 + $0xb8] sm:$0xff]
    %v71 = vld [vmem:[%s1 + $0xc0] sm:$0xff]
    %v72 = vld [vmem:[%s1 + $0xc8] sm:$0xff]
    %v73 = vld [vmem:[%s1 + $0xd0] sm:$0xff]
    %v74 = vld [vmem:[%s1 + $0xd8] sm:$0xff]
    %v75 = vld [vmem:[%s1 + $0xe0] sm:$0xff]
    %v76 = vld [vmem:[%s1 + $0xe8] sm:$0xff]
    %v77 = vld [vmem:[%s1 + $0xf0] sm:$0xff]
    %v78 = vld [vmem:[%s1 + $0xf8] sm:$0xff]
    %v79 = vld [vmem:[%s1 + $0x100] sm:$0xff]
    %v80 = vld [vmem:[%s1 + $0x108] sm:$0xff]
    %v81 = vld [vmem:[%s1 + $0x110] sm:$0xff]
    %v82 = vld [vmem:[%s1 + $0x118] sm:$0xff]
    %v83 = vld [vmem:[%s1 + $0x120] sm:$0xff]
    %v84 = vld [vmem:[%s1 + $0x128] sm:$0xff]
    %v85 = vld [vmem:[%s1 + $0x130] sm:$0xff]
    %v86 = vld [vmem:[%s1 + $0x138] sm:$0xff]
    %v87 = vld [vmem:[%s1 + $0x140] sm:$0xff]
    %v88 = vld [vmem:[%s1 + $0x148] sm:$0xff]
    %v89 = vld [vmem:[%s1 + $0x150] sm:$0xff]
    %v90 = vld [vmem:[%s1 + $0x158] sm:$0xff]
    %v91 = vld [vmem:[%s1 + $0x160] sm:$0xff]
    %v92 = vld [vmem:[%s1 + $0x168] sm:$0xff]
    %v93 = vld [vmem:[%s1 + $0x170] sm:$0xff]
    %v94 = vld [vmem:[%s1 + $0x178] sm:$0xff]
    %v95 = vld [vmem:[%s1 + $0x180] sm:$0xff]
    %v96 = vld [vmem:[%s1 + $0x188] sm:$0xff]
    %v97 = vld [vmem:[%s1 + $0x190] sm:$0xff]
    %v98 = vld [vmem:[%s1 + $0x198] sm:$0xff]
    %v99 = vld [vmem:[%s1 + $0x1a0] sm:$0xff]
    %v100 = vld [vmem:[%s1 + $0x1a8] sm:$0xff]
    %v101 = vld [vmem:[%s1 + $0x1b0] sm:$0xff]
    %v102 = vld [vmem:[%s1 + $0x1b8] sm:$0xff]
    %v103 = vld [vmem:[%s1 + $0x1c0] sm:$0xff]
    %v104 = vld [vmem:[%s1 + $0x1c8] sm:$0xff]
    %v105 = vld [vmem:[%s1 + $0x1d0] sm:$0xff]
    %v106 = vld [vmem:[%s1 + $0x1d8] sm:$0xff]
    %v107 = vld [vmem:[%s1 + $0x1e0] sm:$0xff]
    %v108 = vld [vmem:[%s1 + $0x1e8] sm:$0xff]
    %v109 = vld [vmem:[%s1 + $0x1f0] sm:$0xff]
    %v110 = vld [vmem:[%s1 + $0x1f8] sm:$0xff]
    %v111 = vld [vmem:[%s1 + $0x200] sm:$0xff]
    %v112 = vld [vmem:[%s1 + $0x208] sm:$0xff]
    %v113 = vld [vmem:[%s1 + $0x210] sm:$0xff]
    %v114 = vld [vmem:[%s1 + $0x218] sm:$0xff]
    %v115 = vld [vmem:[%s1 + $0x220] sm:$0xff]
    %v116 = vld [vmem:[%s1 + $0x228] sm:$0xff]
    %v117 = vld [vmem:[%s1 + $0x230] sm:$0xff]
    %v118 = vld [vmem:[%s1 + $0x238] sm:$0xff]
    %v119 = vld [vmem:[%s1 + $0x240] sm:$0xff]
    %v120 = vld [vmem:[%s1 + $0x248] sm:$0xff]
    %v121 = vld [vmem:[%s1 + $0x250] sm:$0xff]
    %v122 = vld [vmem:[%s1 + $0x258] sm:$0xff]
    %v123 = vld [vmem:[%s1 + $0x260] sm:$0xff]
    %v124 = vld [vmem:[%s1 + $0x268] sm:$0xff]
    %v125 = vld [vmem:[%s1 + $0x270] sm:$0xff]
    %v126 = vld [vmem:[%s1 + $0x278] sm:$0xff]
    %v127 = vld [vmem:[%s1 + $0x280] sm:$0xff]
    %v128 = vld [vmem:[%s1 + $0x288] sm:$0xff]
    %v129 = vld [vmem:[%s1 + $0x290] sm:$0xff]
    %v130 = vld [vmem:[%s1 + $0x298] sm:$0xff]
    %v131 = vld [vmem:[%s1 + $0x2a0] sm:$0xff]
    %v132 = vld [vmem:[%s1 + $0x2a8] sm:$0xff]
    %v133 = vld [vmem:[%s1 + $0x2b0] sm:$0xff]
    %v134 = vld [vmem:[%s1 + $0x2b8] sm:$0xff]
    %v135 = vld [vmem:[%s1 + $0x2c0] sm:$0xff]
    %v136 = vld [vmem:[%s1 + $0x2c8] sm:$0xff]
    %v137 = vld [vmem:[%s1 + $0x2d0] sm:$0xff]
    %v138 = vld [vmem:[%s1 + $0x2d8] sm:$0xff]
    %v139 = vld [vmem:[%s1 + $0x2e0] sm:$0xff]
    %v140 = vld [vmem:[%s1 + $0x2e8] sm:$0xff]
    %v141 = vld [vmem:[%s1 + $0x2f0] sm:$0xff]
    %v142 = vld [vmem:[%s1 + $0x2f8] sm:$0xff]
    %v143 = vld [vmem:[%s1 + $0x300] sm:$0xff]
    %v144 = vld [vmem:[%s1 + $0x308] sm:$0xff]
    %v145 = vld [vmem:[%s2] sm:$0x1]
    %v147 = vperm.slane %v145, 0
    %vm149 = vcmask 130048
    %v151 = vsel %vm149, %v39, 0
    %v154 = vsel %vm149, %v46, 0
    %156 = vmatpush.msra.mxu0 %v62
    %157 = vmatpush.msra.mxu0 %v61
    %158 = vmatpush.msra.mxu0 %v60
    %159 = vmatpush.msra.mxu0 %v59
    %160 = vmatpush.msra.mxu0 %v58
    %161 = vmatpush.msra.mxu0 %v57
    %162 = vmatpush.msra.mxu0 %v56
    %163 = vmatpush.msra.mxu0 %v55
    %164 = vmatpush.msra.mxu0 %v54
    %165 = vmatpush.msra.mxu0 %v53
    %166 = vmatpush.msra.mxu0 %v52
    %167 = vmatpush.msra.mxu0 %v51
    %168 = vmatpush.msra.mxu0 %v50
    %169 = vmatpush.msra.mxu0 %v49
    %170 = vmatpush.msra.mxu0 %v48
    %171 = vmatpush.msra.mxu0 %v47
    %172 = vmatmul.f32.gmra.mxu0 %v33
    %v173 = vpop.f32.mrf.mxu0
    %v174 = vadd.f32 %v147, %v173
    %175 = vmatmul.f32.gmra.mxu0 %v40
    %v176 = vpop.f32.mrf.mxu0
    %v177 = vadd.f32 %v147, %v176
    %178 = vdwg.mxu0
    %179 = vmatpush.msra.mxu0 %v78
    %180 = vmatpush.msra.mxu0 %v77
    %181 = vmatpush.msra.mxu0 %v76
    %182 = vmatpush.msra.mxu0 %v75
    %183 = vmatpush.msra.mxu0 %v74
    %184 = vmatpush.msra.mxu0 %v73
    %185 = vmatpush.msra.mxu0 %v72
    %186 = vmatpush.msra.mxu0 %v71
    %187 = vmatpush.msra.mxu0 %v70
    %188 = vmatpush.msra.mxu0 %v69
    %189 = vmatpush.msra.mxu0 %v68
    %190 = vmatpush.msra.mxu0 %v67
    %191 = vmatpush.msra.mxu0 %v66
    %192 = vmatpush.msra.mxu0 %v65
    %193 = vmatpush.msra.mxu0 %v64
    %194 = vmatpush.msra.mxu0 %v63
    %195 = vmatmul.f32.gmra.mxu0 %v34
    %v196 = vpop.f32.mrf.mxu0
    %v197 = vadd.f32 %v174, %v196
    %198 = vmatmul.f32.gmra.mxu0 %v41
    %v199 = vpop.f32.mrf.mxu0
    %v200 = vadd.f32 %v177, %v199
    %201 = vdwg.mxu0
    %202 = vmatpush.msra.mxu0 %v94
    %203 = vmatpush.msra.mxu0 %v93
    %204 = vmatpush.msra.mxu0 %v92
    %205 = vmatpush.msra.mxu0 %v91
    %206 = vmatpush.msra.mxu0 %v90
    %207 = vmatpush.msra.mxu0 %v89
    %208 = vmatpush.msra.mxu0 %v88
    %209 = vmatpush.msra.mxu0 %v87
    %210 = vmatpush.msra.mxu0 %v86
    %211 = vmatpush.msra.mxu0 %v85
    %212 = vmatpush.msra.mxu0 %v84
    %213 = vmatpush.msra.mxu0 %v83
    %214 = vmatpush.msra.mxu0 %v82
    %215 = vmatpush.msra.mxu0 %v81
    %216 = vmatpush.msra.mxu0 %v80
    %217 = vmatpush.msra.mxu0 %v79
    %218 = vmatmul.f32.gmra.mxu0 %v35
    %v219 = vpop.f32.mrf.mxu0
    %v220 = vadd.f32 %v197, %v219
    %221 = vmatmul.f32.gmra.mxu0 %v42
    %v222 = vpop.f32.mrf.mxu0
    %v223 = vadd.f32 %v200, %v222
    %224 = vdwg.mxu0
    %225 = vmatpush.msra.mxu0 %v110
    %226 = vmatpush.msra.mxu0 %v109
    %227 = vmatpush.msra.mxu0 %v108
    %228 = vmatpush.msra.mxu0 %v107
    %229 = vmatpush.msra.mxu0 %v106
    %230 = vmatpush.msra.mxu0 %v105
    %231 = vmatpush.msra.mxu0 %v104
    %232 = vmatpush.msra.mxu0 %v103
    %233 = vmatpush.msra.mxu0 %v102
    %234 = vmatpush.msra.mxu0 %v101
    %235 = vmatpush.msra.mxu0 %v100
    %236 = vmatpush.msra.mxu0 %v99
    %237 = vmatpush.msra.mxu0 %v98
    %238 = vmatpush.msra.mxu0 %v97
    %239 = vmatpush.msra.mxu0 %v96
    %240 = vmatpush.msra.mxu0 %v95
    %241 = vmatmul.f32.gmra.mxu0 %v36
    %v242 = vpop.f32.mrf.mxu0
    %v243 = vadd.f32 %v220, %v242
    %244 = vmatmul.f32.gmra.mxu0 %v43
    %v245 = vpop.f32.mrf.mxu0
    %v246 = vadd.f32 %v223, %v245
    %247 = vdwg.mxu0
    %248 = vmatpush.msra.mxu0 %v126
    %249 = vmatpush.msra.mxu0 %v125
    %250 = vmatpush.msra.mxu0 %v124
    %251 = vmatpush.msra.mxu0 %v123
    %252 = vmatpush.msra.mxu0 %v122
    %253 = vmatpush.msra.mxu0 %v121
    %254 = vmatpush.msra.mxu0 %v120
    %255 = vmatpush.msra.mxu0 %v119
    %256 = vmatpush.msra.mxu0 %v118
    %257 = vmatpush.msra.mxu0 %v117
    %258 = vmatpush.msra.mxu0 %v116
    %259 = vmatpush.msra.mxu0 %v115
    %260 = vmatpush.msra.mxu0 %v114
    %261 = vmatpush.msra.mxu0 %v113
    %262 = vmatpush.msra.mxu0 %v112
    %263 = vmatpush.msra.mxu0 %v111
    %264 = vmatmul.f32.gmra.mxu0 %v37
    %v265 = vpop.f32.mrf.mxu0
    %v266 = vadd.f32 %v243, %v265
    %267 = vmatmul.f32.gmra.mxu0 %v44
    %v268 = vpop.f32.mrf.mxu0
    %v269 = vadd.f32 %v246, %v268
    %270 = vdwg.mxu0
    %271 = vmatpush.msra.mxu0 %v142
    %272 = vmatpush.msra.mxu0 %v141
    %273 = vmatpush.msra.mxu0 %v140
    %274 = vmatpush.msra.mxu0 %v139
    %275 = vmatpush.msra.mxu0 %v138
    %276 = vmatpush.msra.mxu0 %v137
    %277 = vmatpush.msra.mxu0 %v136
    %278 = vmatpush.msra.mxu0 %v135
    %279 = vmatpush.msra.mxu0 %v134
    %280 = vmatpush.msra.mxu0 %v133
    %281 = vmatpush.msra.mxu0 %v132
    %282 = vmatpush.msra.mxu0 %v131
    %283 = vmatpush.msra.mxu0 %v130
    %284 = vmatpush.msra.mxu0 %v129
    %285 = vmatpush.msra.mxu0 %v128
    %286 = vmatpush.msra.mxu0 %v127
    %287 = vmatmul.f32.gmra.mxu0 %v38
    %v288 = vpop.f32.mrf.mxu0
    %v289 = vadd.f32 %v266, %v288
    %290 = vmatmul.f32.gmra.mxu0 %v45
    %v291 = vpop.f32.mrf.mxu0
    %v292 = vadd.f32 %v269, %v291
    %293 = vdwg.mxu0
    %294 = vmatpush.msra.mxu0 0.0
    %295 = vmatpush.msra.mxu0 0.0
    %296 = vmatpush.msra.mxu0 0.0
    %297 = vmatpush.msra.mxu0 0.0
    %298 = vmatpush.msra.mxu0 0.0
    %299 = vmatpush.msra.mxu0 0.0
    %300 = vmatpush.msra.mxu0 0.0
    %301 = vmatpush.msra.mxu0 0.0
    %302 = vmatpush.msra.mxu0 0.0
    %303 = vmatpush.msra.mxu0 0.0
    %304 = vmatpush.msra.mxu0 0.0
    %305 = vmatpush.msra.mxu0 0.0
    %306 = vmatpush.msra.mxu0 0.0
    %307 = vmatpush.msra.mxu0 0.0
    %308 = vmatpush.msra.mxu0 %v144
    %309 = vmatpush.msra.mxu0 %v143
    %310 = vmatmul.f32.gmra.mxu0 %v151
    %v311 = vpop.f32.mrf.mxu0
    %v312 = vadd.f32 %v289, %v311
    %313 = vmatmul.f32.gmra.mxu0 %v154
    %v314 = vpop.f32.mrf.mxu0
    %v315 = vadd.f32 %v292, %v314
    %316 = vdwg.mxu0
    %v317 = vmax.f32 %v312, 0.0
    %v318 = vmax.f32 %v315, 0.0
    %v319 = vld [vmem:[%s3] sm:$0xff]
    %v320 = vld [vmem:[%s3 + $0x8] sm:$0xff]
    %v321 = vld [vmem:[%s3 + $0x10] sm:$0xff]
    %v322 = vld [vmem:[%s3 + $0x18] sm:$0xff]
    %v323 = vld [vmem:[%s4] sm:$0x1]
    %v325 = vperm.slane %v323, 0
    %vm327 = vcmask 261120
    %v329 = vsel %vm327, %v317, 0
    %v332 = vsel %vm327, %v318, 0
    %334 = vmatpush.msra.mxu0 0.0
    %335 = vmatpush.msra.mxu0 0.0
    %336 = vmatpush.msra.mxu0 0.0
    %337 = vmatpush.msra.mxu0 0.0
    %338 = vmatpush.msra.mxu0 0.0
    %339 = vmatpush.msra.mxu0 0.0
    %340 = vmatpush.msra.mxu0 0.0
    %341 = vmatpush.msra.mxu0 0.0
    %342 = vmatpush.msra.mxu0 0.0
    %343 = vmatpush.msra.mxu0 0.0
    %344 = vmatpush.msra.mxu0 0.0
    %345 = vmatpush.msra.mxu0 0.0
    %346 = vmatpush.msra.mxu0 %v322
    %347 = vmatpush.msra.mxu0 %v321
    %348 = vmatpush.msra.mxu0 %v320
    %349 = vmatpush.msra.mxu0 %v319
    %350 = vmatmul.f32.gmra.mxu0 %v329
    %v351 = vpop.f32.mrf.mxu0
    %v352 = vadd.f32 %v325, %v351
    %353 = vmatmul.f32.gmra.mxu0 %v332
    %v354 = vpop.f32.mrf.mxu0
    %v355 = vadd.f32 %v325, %v354
    %356 = vdwg.mxu0
    %v357 = vmax.f32 %v352, 0.0
    %v358 = vmax.f32 %v355, 0.0
    %v359 = vld [vmem:[%s5] sm:$0xff]
    %v360 = vld [vmem:[%s5 + $0x8] sm:$0xff]
    %v361 = vld [vmem:[%s6] sm:$0x1]
    %v363 = vperm.slane %v361, 0
    %v366 = vsel %vm149, %v357, 0
    %v369 = vsel %vm149, %v358, 0
    %371 = vmatpush.msra.mxu0 0.0
    %372 = vmatpush.msra.mxu0 0.0
    %373 = vmatpush.msra.mxu0 0.0
    %374 = vmatpush.msra.mxu0 0.0
    %375 = vmatpush.msra.mxu0 0.0
    %376 = vmatpush.msra.mxu0 0.0
    %377 = vmatpush.msra.mxu0 0.0
    %378 = vmatpush.msra.mxu0 0.0
    %379 = vmatpush.msra.mxu0 0.0
    %380 = vmatpush.msra.mxu0 0.0
    %381 = vmatpush.msra.mxu0 0.0
    %382 = vmatpush.msra.mxu0 0.0
    %383 = vmatpush.msra.mxu0 0.0
    %384 = vmatpush.msra.mxu0 0.0
    %385 = vmatpush.msra.mxu0 %v360
    %386 = vmatpush.msra.mxu0 %v359
    %387 = vmatmul.f32.gmra.mxu0 %v366
    %v388 = vpop.f32.mrf.mxu0
    %v389 = vadd.f32 %v363, %v388
    %390 = vmatmul.f32.gmra.mxu0 %v369
    %v391 = vpop.f32.mrf.mxu0
    %v392 = vadd.f32 %v363, %v391
    %393 = vdwg.mxu0
    %v394 = vmax.f32 %v389, 0.0
    %v395 = vmax.f32 %v392, 0.0
    %v396 = vld [vmem:[%s7] sm:$0xff]
    %v397 = vld [vmem:[%s7 + $0x8] sm:$0xff]
    %v398 = vld [vmem:[%s7 + $0x10] sm:$0xff]
    %v399 = vld [vmem:[%s7 + $0x18] sm:$0xff]
    %v400 = vld [vmem:[%s8] sm:$0x1]
    %v402 = vperm.slane %v400, 0
    %v405 = vsel %vm327, %v394, 0
    %v408 = vsel %vm327, %v395, 0
    %410 = vmatpush.msra.mxu0 0.0
    %411 = vmatpush.msra.mxu0 0.0
    %412 = vmatpush.msra.mxu0 0.0
    %413 = vmatpush.msra.mxu0 0.0
    %414 = vmatpush.msra.mxu0 0.0
    %415 = vmatpush.msra.mxu0 0.0
    %416 = vmatpush.msra.mxu0 0.0
    %417 = vmatpush.msra.mxu0 0.0
    %418 = vmatpush.msra.mxu0 0.0
    %419 = vmatpush.msra.mxu0 0.0
    %420 = vmatpush.msra.mxu0 0.0
    %421 = vmatpush.msra.mxu0 0.0
    %422 = vmatpush.msra.mxu0 %v399
    %423 = vmatpush.msra.mxu0 %v398
    %424 = vmatpush.msra.mxu0 %v397
    %425 = vmatpush.msra.mxu0 %v396
    %426 = vmatmul.f32.gmra.mxu0 %v405
    %v427 = vpop.f32.mrf.mxu0
    %v428 = vadd.f32 %v402, %v427
    %429 = vmatmul.f32.gmra.mxu0 %v408
    %v430 = vpop.f32.mrf.mxu0
    %v431 = vadd.f32 %v402, %v430
    %432 = vdwg.mxu0
    %vm433 = vcmask 80896
    %434 = vst.msk [vmem:[#allocation2] sm:$0xff] %vm433, %v428
    %435 = vst.msk [vmem:[#allocation2 + $0x8] sm:$0xff] %vm433, %v431
    // Predicated region
    $region38: #{mlp_forward.1} parent=1 // pred_check
      _
    $region39: #{mlp_forward.1} parent=1 // pred_check_branch
      %437 = sbr.rel (0) target = $region41
    $region40: #{mlp_forward.1} parent=1 // pred_region
      %439 = vsyncadd [#allocation3], 128
      %s440 = sshll.u32 [#allocation2], 4
      %s441 = int_to_ptr.vmem [resolvable:$true] %s440
      %s442 = sshll.u32 %s9, 4
      %s443 = int_to_ptr.hbm [resolvable:$true] %s442
      %448 = dma.vmem_to_hbm [thread:$0]  %s441, 128, %s443, [#allocation3], 128, 128, 8
    $region41: #{mlp_forward.1} parent=1 // pred_fallthru
      _
    // Predicated region
    $region42: #{mlp_forward.1} parent=1 // pred_check
      _
    $region43: #{mlp_forward.1} parent=1 // pred_check_branch
      %450 = sbr.rel (0) target = $region45
    $region44: #{mlp_forward.1} parent=1 // pred_region
      %452 = dma.done [#allocation3], 256
    $region45: #{mlp_forward.1} parent=1 // pred_fallthru
      _
    %453 = vsyncpa [#allocation3], 1

</llo_original>
